<compile_context>
chip_gen: v5e
topology: v5e:2x2
jax: 0.10.0
libtpu: 0.0.40
codegen_flags: <defaults>
</compile_context>

<pallas_src>
import functools

import numpy as np

import jax
import jax.numpy as jnp
from jax.experimental import pallas as pl
from jax.experimental.pallas import tpu as pltpu

HIDDEN = 300                    # logical hidden size (hard-coded in CMPNEncoder)
HP = 384                        # lane-padded hidden size (3 * 128)
DEPTH = 3                       # hard-coded in CMPNEncoder.__init__

# Flip to jnp.bfloat16 only after validating against an f32 reference with a
# tolerance (review correctness concern); f32 accumulation is kept either way.
MATMUL_DTYPE = jnp.float32


def _round_up(x, m):
    return ((x + m - 1) // m) * m


def _default_vmem_limit():
    """Generation-aware VMEM budget: ~3/4 of physical per-TC VMEM, <=100 MiB."""
    try:
        cap = getattr(pltpu.get_tpu_info(), "vmem_capacity_bytes", None)
    except Exception:
        cap = None
    if not cap:
        cap = 64 * 1024 * 1024          # conservative default (v7x per-TC)
    return min((int(cap) * 3) // 4, 100 * 1024 * 1024)


VMEM_LIMIT = _default_vmem_limit()


def _cparams(semantics):
    return pltpu.CompilerParams(dimension_semantics=semantics,
                                vmem_limit_bytes=VMEM_LIMIT)


def _mxu_dot(a, b):
    return jnp.dot(a.astype(MATMUL_DTYPE), b.astype(MATMUL_DTYPE),
                   preferred_element_type=jnp.float32)


def _pad_rows(a, n_pad):
    n = a.shape[0]
    if n_pad == n:
        return a
    return jnp.pad(a, ((0, n_pad - n),) + ((0, 0),) * (a.ndim - 1))


# ----------------------------------------------------------------------------
# Kernel 1: dense linear layer (optional bias, optional ReLU), row-tiled grid.
# ----------------------------------------------------------------------------
def _linear_kernel(*refs, relu, has_bias):
    x_ref, w_ref = refs[0], refs[1]
    o_ref = refs[-1]
    y = _mxu_dot(x_ref[...], w_ref[...])
    if has_bias:
        y = y + refs[2][...]
    if relu:
        y = jnp.maximum(y, 0.0)
    o_ref[...] = y


def pallas_linear(x, w, b=None, relu=False, row_tile=512):
    """y = x @ w (+ b) (+ relu).  w stored (in_dim, out_dim)."""
    n, k = x.shape
    m = w.shape[1]
    n8 = _round_up(n, 8)
    tile = row_tile if n8 >= row_tile else n8
    n_pad = _round_up(n8, tile)

    xp = _pad_rows(x.astype(jnp.float32), n_pad)
    args = [xp, w.astype(jnp.float32)]
    in_specs = [pl.BlockSpec((tile, k), lambda i: (i, 0)),
                pl.BlockSpec((k, m), lambda i: (0, 0))]
    has_bias = b is not None
    if has_bias:
        args.append(jnp.asarray(b, jnp.float32).reshape(1, m))
        in_specs.append(pl.BlockSpec((1, m), lambda i: (0, 0)))

    out = pl.pallas_call(
        functools.partial(_linear_kernel, relu=relu, has_bias=has_bias),
        out_shape=jax.ShapeDtypeStruct((n_pad, m), jnp.float32),
        grid=(n_pad // tile,),
        in_specs=in_specs,
        out_specs=pl.BlockSpec((tile, m), lambda i: (i, 0)),
        compiler_params=_cparams(("parallel",)),
    )(*args)
    return out[:n]


# ----------------------------------------------------------------------------
# Kernel 2: neighbor aggregation   out = base + sum_j(nei) * max_j(nei)
#   nei is the XLA-gathered (and a2b==0 masked-to-zero) neighbor messages,
#   so masked slots contribute exact zeros to both the sum and the max —
#   identical to chemprop's index_select_ND semantics.
# ----------------------------------------------------------------------------
def _aggregate_kernel(nei_ref, base_ref, o_ref):
    mb = nei_ref.shape[1]
    s = nei_ref[:, 0, :]
    mx = s
    for j in range(1, mb):                 # mb is small & static -> unrolled
        v = nei_ref[:, j, :]
        s = s + v
        mx = jnp.maximum(mx, v)
    o_ref[...] = base_ref[...] + s * mx


def pallas_aggregate(nei, base, row_tile=256):
    n, mb, hp = nei.shape
    n8 = _round_up(n, 8)
    tile = row_tile if n8 >= row_tile else n8
    n_pad = _round_up(n8, tile)
    out = pl.pallas_call(
        _aggregate_kernel,
        out_shape=jax.ShapeDtypeStruct((n_pad, hp), jnp.float32),
        grid=(n_pad // tile,),
        in_specs=[pl.BlockSpec((tile, mb, hp), lambda i: (i, 0, 0)),
                  pl.BlockSpec((tile, hp), lambda i: (i, 0))],
        out_specs=pl.BlockSpec((tile, hp), lambda i: (i, 0)),
        compiler_params=_cparams(("parallel",)),
    )(_pad_rows(nei.astype(jnp.float32), n_pad),
      _pad_rows(base.astype(jnp.float32), n_pad))
    return out[:n]


# ----------------------------------------------------------------------------
# Kernel 3: bond update   out = relu(input_bond + (matom[b2a] - mbond[b2revb]) @ W_h)
#   (the two gathered operands come in already gathered; diff + matmul +
#    residual + ReLU are fused here)
# ----------------------------------------------------------------------------
def _bond_update_kernel(ma_ref, rev_ref, inb_ref, w_ref, o_ref):
    diff = ma_ref[...] - rev_ref[...]
    o_ref[...] = jnp.maximum(inb_ref[...] + _mxu_dot(diff, w_ref[...]), 0.0)


def pallas_bond_update(ma_g, rev, input_bond, w_h, row_tile=512):
    n, hp = ma_g.shape
    n8 = _round_up(n, 8)
    tile = row_tile if n8 >= row_tile else n8
    n_pad = _round_up(n8, tile)
    out = pl.pallas_call(
        _bond_update_kernel,
        out_shape=jax.ShapeDtypeStruct((n_pad, hp), jnp.float32),
        grid=(n_pad // tile,),
        in_specs=[pl.BlockSpec((tile, hp), lambda i: (i, 0))] * 3
        + [pl.BlockSpec((hp, hp), lambda i: (0, 0))],
        out_specs=pl.BlockSpec((tile, hp), lambda i: (i, 0)),
        compiler_params=_cparams(("parallel",)),
    )(_pad_rows(ma_g.astype(jnp.float32), n_pad),
      _pad_rows(rev.astype(jnp.float32), n_pad),
      _pad_rows(input_bond.astype(jnp.float32), n_pad),
      w_h.astype(jnp.float32))
    return out[:n]


# ----------------------------------------------------------------------------
# Kernel 4: final aggregation + lr projection + gru-bias + ReLU (fused).
#   node    = agg @ lr0 + message_atom @ lr1 + input_atom @ lr2
#   message = relu(node + gru_bias)
# ----------------------------------------------------------------------------
def _node_message_kernel(nei_ref, matom_ref, inatom_ref, lr_ref, bias_ref,
                         node_ref, msg_ref):
    mb = nei_ref.shape[1]
    s = nei_ref[:, 0, :]
    mx = s
    for j in range(1, mb):
        v = nei_ref[:, j, :]
        s = s + v
        mx = jnp.maximum(mx, v)
    agg = s * mx
    node = (_mxu_dot(agg, lr_ref[0]) + _mxu_dot(matom_ref[...], lr_ref[1])
            + _mxu_dot(inatom_ref[...], lr_ref[2]))
    node_ref[...] = node
    msg_ref[...] = jnp.maximum(node + bias_ref[...], 0.0)


def pallas_node_message(nei, matom, inatom, lr_w, gru_bias_row, row_tile=256):
    n, mb, hp = nei.shape
    n8 = _round_up(n, 8)
    tile = row_tile if n8 >= row_tile else n8
    n_pad = _round_up(n8, tile)
    node, msg = pl.pallas_call(
        _node_message_kernel,
        out_shape=(jax.ShapeDtypeStruct((n_pad, hp), jnp.float32),
                   jax.ShapeDtypeStruct((n_pad, hp), jnp.float32)),
        grid=(n_pad // tile,),
        in_specs=[pl.BlockSpec((tile, mb, hp), lambda i: (i, 0, 0)),
                  pl.BlockSpec((tile, hp), lambda i: (i, 0)),
                  pl.BlockSpec((tile, hp), lambda i: (i, 0)),
                  pl.BlockSpec((3, hp, hp), lambda i: (0, 0, 0)),
                  pl.BlockSpec((1, hp), lambda i: (0, 0))],
        out_specs=(pl.BlockSpec((tile, hp), lambda i: (i, 0)),
                   pl.BlockSpec((tile, hp), lambda i: (i, 0))),
        compiler_params=_cparams(("parallel",)),
    )(_pad_rows(nei.astype(jnp.float32), n_pad),
      _pad_rows(matom.astype(jnp.float32), n_pad),
      _pad_rows(inatom.astype(jnp.float32), n_pad),
      lr_w.astype(jnp.float32), gru_bias_row.astype(jnp.float32))
    return node[:n], msg[:n]


# ----------------------------------------------------------------------------
# Kernel 5: bidirectional GRU recurrence, grid = (direction, time).
#   Input-gate projections (both directions) are hoisted outside into one
#   pallas_linear matmul; only the (B,HP)@(HP,3HP) hidden matmul runs per
#   step.  Direction axis is "parallel" (2 TCs on v7x); per-step resident
#   footprint is O(B*3HP), streamed/double-buffered by BlockSpec.
#   The backward direction consumes time-reversed gates and its outputs are
#   flipped back in the wrapper.
# ----------------------------------------------------------------------------
def _gru_step_kernel(gi_ref, h0_ref, wh_ref, bh_ref, out_ref, h_scr, *, hp):
    @pl.when(pl.program_id(1) == 0)
    def _():
        h_scr[...] = h0_ref[...]

    h = h_scr[...]
    gh = _mxu_dot(h, wh_ref[...]) + bh_ref[...]
    gi = gi_ref[...]
    r = jax.nn.sigmoid(gi[:, 0:hp] + gh[:, 0:hp])
    z = jax.nn.sigmoid(gi[:, hp:2 * hp] + gh[:, hp:2 * hp])
    n = jnp.tanh(gi[:, 2 * hp:] + r * gh[:, 2 * hp:])
    h_new = (1.0 - z) * n + z * h
    h_scr[...] = h_new
    out_ref[...] = h_new


def pallas_bigru(gi_all, h0, wh_all, bh_all):
    """gi_all: (2, T, B, 3HP) with gi_all[1] time-reversed.  Returns fwd/bwd
    output sequences aligned to the original time axis, each (T, B, HP)."""
    _, T, B, G = gi_all.shape
    hp = G // 3
    out = pl.pallas_call(
        functools.partial(_gru_step_kernel, hp=hp),
        out_shape=jax.ShapeDtypeStruct((2, T, B, hp), jnp.float32),
        grid=(2, T),
        in_specs=[
            pl.BlockSpec((None, None, B, G), lambda d, t: (d, t, 0, 0)),
            pl.BlockSpec((B, hp), lambda d, t: (0, 0)),
            pl.BlockSpec((None, hp, G), lambda d, t: (d, 0, 0)),
            pl.BlockSpec((None, 1, G), lambda d, t: (d, 0, 0)),
        ],
        out_specs=pl.BlockSpec((None, None, B, hp), lambda d, t: (d, t, 0, 0)),
        scratch_shapes=[pltpu.VMEM((B, hp), jnp.float32)],
        compiler_params=_cparams(("parallel", "arbitrary")),
    )(gi_all.astype(jnp.float32), h0.astype(jnp.float32),
      wh_all.astype(jnp.float32), bh_all.astype(jnp.float32))
    return out[0], out[1][::-1]


# ----------------------------------------------------------------------------
# Parameter initialization (deterministic, synthetic, zero-padded to HP lanes;
# feature dims zero-padded to multiples of 128 and folded into W_i_*).
# ----------------------------------------------------------------------------
def init_params(key, atom_fdim, bond_fdim, hidden=HIDDEN, hp=HP):
    keys = jax.random.split(key, 16)

    def lin_t(k, in_d, out_d):
        return jax.random.normal(k, (in_d, out_d), jnp.float32) / np.sqrt(in_d)

    def pad_to(w, r_to, c_to):
        return jnp.pad(w, ((0, r_to - w.shape[0]), (0, c_to - w.shape[1])))

    af_pad = _round_up(atom_fdim, 128)
    bf_pad = _round_up(bond_fdim, 128)
    s = 1.0 / float(np.sqrt(hidden))

    w_i_atom = pad_to(lin_t(keys[0], atom_fdim, hidden), af_pad, hp)  # bias=False
    w_i_bond = pad_to(lin_t(keys[1], bond_fdim, hidden), bf_pad, hp)  # bias=False
    w_h = jnp.stack([pad_to(lin_t(keys[2 + d], hidden, hidden), hp, hp)
                     for d in range(DEPTH - 1)])
    lr_w = jnp.stack([pad_to(lin_t(keys[4 + i], hidden, hidden), hp, hp)
                      for i in range(3)])                              # lr, bias=False
    w_o = jnp.concatenate(
        [pad_to(lin_t(keys[7], hidden, hidden), hp, hp),
         pad_to(lin_t(keys[8], hidden, hidden), hp, hp)], axis=0)      # (2HP, HP)
    w_o_b = jnp.pad(jax.random.normal(keys[9], (hidden,), jnp.float32) * 0.01,
                    (0, hp - hidden))
    gru_bias = jnp.pad(
        jax.random.uniform(keys[10], (hidden,), jnp.float32, minval=-s, maxval=s),
        (0, hp - hidden)).reshape(1, hp)

    def gru_dir(kw, kb):
        ws = jax.random.normal(kw, (6, hidden, hidden), jnp.float32) * s
        bs = jax.random.normal(kb, (6, hidden), jnp.float32) * s
        wi = jnp.concatenate([pad_to(ws[i], hp, hp) for i in range(3)], axis=1)
        wh = jnp.concatenate([pad_to(ws[3 + i], hp, hp) for i in range(3)], axis=1)
        bi = jnp.concatenate([jnp.pad(bs[i], (0, hp - hidden))
                              for i in range(3)]).reshape(1, 3 * hp)
        bh = jnp.concatenate([jnp.pad(bs[3 + i], (0, hp - hidden))
                              for i in range(3)]).reshape(1, 3 * hp)
        return wi, bi, wh, bh

    wi_f, bi_f, wh_f, bh_f = gru_dir(keys[11], keys[12])
    wi_b, bi_b, wh_b, bh_b = gru_dir(keys[13], keys[14])

    return {
        "W_i_atom_t": w_i_atom, "W_i_bond_t": w_i_bond,
        "W_h_t": w_h, "lr_t": lr_w,
        "W_o_t": w_o, "W_o_b": w_o_b,
        "gru_bias": gru_bias,
        # fused input-gate projection weights for both directions:
        "gru_wi_all": jnp.concatenate([wi_f, wi_b], axis=1),   # (HP, 6HP)
        "gru_bi_all": jnp.concatenate([bi_f, bi_b], axis=1),   # (1, 6HP)
        # hidden-gate weights stacked per direction:
        "gru_wh": jnp.stack([wh_f, wh_b]),                     # (2, HP, 3HP)
        "gru_bh": jnp.stack([bh_f, bh_b]),                     # (2, 1, 3HP)
    }


# ----------------------------------------------------------------------------
# Full CMPNEncoder forward
# ----------------------------------------------------------------------------
def cmpn_encoder_forward(params, f_atoms, f_bonds, a2b, b2a, b2revb, a_scope):
    na_real = f_atoms.shape[0]           # num_atoms + 1 (row 0 = padding row)

    af_pad = params["W_i_atom_t"].shape[0]
    bf_pad = params["W_i_bond_t"].shape[0]
    f_atoms_p = jnp.pad(f_atoms.astype(jnp.float32),
                        ((0, 0), (0, af_pad - f_atoms.shape[1])))
    f_bonds_p = jnp.pad(f_bonds.astype(jnp.float32),
                        ((0, 0), (0, bf_pad - f_bonds.shape[1])))
    a2b = jnp.asarray(a2b, jnp.int32)
    b2a = jnp.asarray(b2a, jnp.int32)
    b2revb = jnp.asarray(b2revb, jnp.int32)

    # W_i_atom / W_i_bond + ReLU.
    # TODO(synk): W_i_atom.prompt_generator is external to CMPNE.py; skipped.
    input_atom = pallas_linear(f_atoms_p, params["W_i_atom_t"], relu=True)
    input_bond = pallas_linear(f_bonds_p, params["W_i_bond_t"], relu=True)

    message_atom = input_atom
    message_bond = input_bond
    nbr_mask = (a2b != 0)[:, :, None]           # (na, mb, 1)

    # Depth loop: XLA gathers (linear cost) + Pallas dense kernels.
    for d in range(DEPTH - 1):
        nei = jnp.where(nbr_mask, jnp.take(message_bond, a2b, axis=0), 0.0)
        message_atom = pallas_aggregate(nei, message_atom)
        ma_g = jnp.take(message_atom, b2a, axis=0)
        rev = jnp.take(message_bond, b2revb, axis=0)
        message_bond = pallas_bond_update(ma_g, rev, input_bond,
                                          params["W_h_t"][d])

    nei = jnp.where(nbr_mask, jnp.take(message_bond, a2b, axis=0), 0.0)
    node, message = pallas_node_message(nei, message_atom, input_atom,
                                        params["lr_t"], params["gru_bias"])

    # ---------------- BatchGRU (packing via trace-time indices + gathers) ----
    n_mols = len(a_scope)
    T = max(size for _, size in a_scope)
    B = _round_up(n_mols, 8)

    gather_idx = np.zeros((T, B), np.int32)
    tmask = np.zeros((T, B, 1), np.float32)
    valid = np.zeros((B, 1), np.float32)
    flat_idx = []
    for i, (start, size) in enumerate(a_scope):
        assert size > 0
        valid[i, 0] = 1.0
        for t in range(size):
            gather_idx[t, i] = start + t
            tmask[t, i, 0] = 1.0
            flat_idx.append(t * B + i)
    gather_idx = jnp.asarray(gather_idx)
    tmask = jnp.asarray(tmask)
    valid = jnp.asarray(valid)
    flat_idx = jnp.asarray(np.array(flat_idx, np.int32))

    padded = jnp.take(message, gather_idx, axis=0) * tmask          # (T, B, HP)
    hid_g = jnp.take(node, gather_idx, axis=0)
    h0 = jnp.max(jnp.where(tmask > 0, hid_g, -jnp.inf), axis=0)
    h0 = jnp.where(valid > 0, h0, 0.0)                              # (B, HP)

    # Hoisted input-gate projections (both directions, one MXU matmul).
    x_flat = padded.reshape(T * B, HP)
    gi_both = pallas_linear(x_flat, params["gru_wi_all"], b=params["gru_bi_all"])
    gi_f = gi_both[:, :3 * HP].reshape(T, B, 3 * HP)
    gi_b = gi_both[:, 3 * HP:].reshape(T, B, 3 * HP)
    gi_all = jnp.stack([gi_f, gi_b[::-1]], axis=0)                  # (2, T, B, 3HP)

    out_f, out_b = pallas_bigru(gi_all, h0, params["gru_wh"], params["gru_bh"])

    out_flat = jnp.concatenate([out_f, out_b], axis=-1).reshape(T * B, 2 * HP)
    unpad = jnp.take(out_flat, flat_idx, axis=0)                    # (num_atoms, 2HP)
    row0 = jnp.concatenate([message[0:1], message[0:1]], axis=1)
    gru_out = jnp.concatenate([row0, unpad], axis=0)                # (na_real, 2HP)

    # W_o (+bias) + ReLU; dropout p=0 is identity.
    atom_hiddens = pallas_linear(gru_out, params["W_o_t"], b=params["W_o_b"],
                                 relu=True)

    # Per-molecule mean pooling as a (n_mols, na) x (na, HP) matmul on the MXU.
    pool = np.zeros((n_mols, na_real), np.float32)
    for i, (start, size) in enumerate(a_scope):
        pool[i, start:start + size] = 1.0 / size
    mol_vecs = pallas_linear(jnp.asarray(pool), atom_hiddens)

    return mol_vecs[:, :HIDDEN]


# ----------------------------------------------------------------------------
# Driver
# ----------------------------------------------------------------------------
if __name__ == "__main__":
    key = jax.random.PRNGKey(0)
    k_param, k_atom, k_bond = jax.random.split(key, 3)

    atom_fdim, bond_fdim = 40, 50
    # small synthetic molecule graph: 2 molecules (chain of 3 atoms + chain of 4)
    # row 0 of atoms/bonds is the padding row, as in chemprop-style BatchMolGraph
    num_atoms, num_bonds = 7, 10

    f_atoms = jax.random.normal(k_atom, (num_atoms + 1, atom_fdim), jnp.float32)
    f_atoms = f_atoms.at[0].set(0.0)
    f_bonds = jax.random.normal(k_bond, (num_bonds + 1, bond_fdim), jnp.float32)
    f_bonds = f_bonds.at[0].set(0.0)

    a2b = jnp.array([[0, 0],      # padding atom
                     [2, 0],
                     [1, 4],
                     [3, 0],
                     [6, 0],
                     [5, 8],
                     [7, 10],
                     [9, 0]], dtype=jnp.int32)
    b2a = jnp.array([0, 1, 2, 2, 3, 4, 5, 5, 6, 6, 7], dtype=jnp.int32)
    b2revb = jnp.array([0, 2, 1, 4, 3, 6, 5, 8, 7, 10, 9], dtype=jnp.int32)
    a_scope = [(1, 3), (4, 4)]

    params = init_params(k_param, atom_fdim, bond_fdim)

    mol_vecs = cmpn_encoder_forward(params, f_atoms, f_bonds, a2b, b2a, b2revb,
                                    a_scope)
    mol_vecs = jax.block_until_ready(mol_vecs)

    assert mol_vecs.shape == (len(a_scope), HIDDEN)
    assert bool(jnp.all(jnp.isfinite(mol_vecs)))
    print("KERNEL_OK")
</pallas_src>

<mosaic_0001>
module attributes {stable_mosaic.version = 11 : i64} {
  func.func @_linear_kernel(%arg0: i32, %arg1: memref<8x128xf32, #tpu.memory_space<vmem>>, %arg2: memref<128x384xf32, #tpu.memory_space<vmem>>, %arg3: memref<8x384xf32, #tpu.memory_space<vmem>>) attributes {dimension_semantics = [#tpu.dimension_semantics<parallel>], iteration_bounds = array<i64: 1>, scalar_prefetch = 0 : i64, scratch_operands = 0 : i64, tpu.core_type = #tpu.core_type<tc>, window_params = [{transform_indices = @transform_0, window_bounds = array<i64: 8, 128>}, {pipeline_mode = #tpu.pipeline_mode<synchronous>, transform_indices = @transform_1, window_bounds = array<i64: 128, 384>}, {transform_indices = @transform_2, window_bounds = array<i64: 8, 384>}]} {
    %c0 = arith.constant 0 : index
    %c0_0 = arith.constant 0 : index
    %0 = vector.load %arg1[%c0, %c0_0] : memref<8x128xf32, #tpu.memory_space<vmem>>, vector<8x128xf32>
    %c0_1 = arith.constant 0 : index
    %c0_2 = arith.constant 0 : index
    %1 = vector.load %arg2[%c0_1, %c0_2] : memref<128x384xf32, #tpu.memory_space<vmem>>, vector<128x384xf32>
    %cst = arith.constant dense<0.000000e+00> : vector<8x384xf32>
    %2 = tpu.matmul %0, %1, %cst {dimension_numbers = #tpu.dot_dimension_numbers<[1], [0], [0], [1], [0, 0, 1, 1], [], []>} : vector<8x128xf32>, vector<128x384xf32>, vector<8x384xf32> -> vector<8x384xf32>
    %cst_3 = arith.constant 0.000000e+00 : f32
    %3 = vector.broadcast %cst_3 : f32 to vector<8x384xf32>
    %4 = arith.maximumf %2, %3 : vector<8x384xf32>
    %c0_4 = arith.constant 0 : index
    %c0_5 = arith.constant 0 : index
    %5 = vector.load %arg3[%c0_4, %c0_5] : memref<8x384xf32, #tpu.memory_space<vmem>>, vector<8x384xf32>
    tpu.vector_store %arg3[%c0_4, %c0_5], %4 {strides = array<i32>} : memref<8x384xf32, #tpu.memory_space<vmem>>, vector<8x384xf32>,
    return
  }
  func.func @transform_0(%arg0: i32) -> (i32, i32) {
    %c0_i32 = arith.constant 0 : i32
    %c0_i32_0 = arith.constant 0 : i32
    return %arg0, %c0_i32 : i32, i32
  }
  func.func @transform_1(%arg0: i32) -> (i32, i32) {
    %c0_i32 = arith.constant 0 : i32
    %c0_i32_0 = arith.constant 0 : i32
    %c0_i32_1 = arith.constant 0 : i32
    return %c0_i32, %c0_i32_0 : i32, i32
  }
  func.func @transform_2(%arg0: i32) -> (i32, i32) {
    %c0_i32 = arith.constant 0 : i32
    %c0_i32_0 = arith.constant 0 : i32
    return %arg0, %c0_i32 : i32, i32
  }
}

</mosaic_0001>

<llo_original>
// kernel: tpu_custom_call.1
$region0: #{tpu_custom_call.1}
  #allocation0 [shape = 'u32[]', space=smem, size = 0x4, offset = 0x4, fixed_abs, tag = 'smem constant byte address 0x4 - core index']
  #allocation1 [shape = 'u32[72,128]{1,0:T(1,128)}', space=vmem, size = 0x9000, scoped, tag = 'internal scratch']
  %s0 = inlined_call_operand.hbm [shape: f32[8,128], index: 0, kind: input, shape index: {}]
  %s1 = inlined_call_operand.hbm [shape: f32[128,384], index: 1, kind: input, shape index: {}]
  %s2 = inlined_call_operand.hbm [shape: f32[8,384], index: 2, kind: output, shape index: {}]
  %s3 = sld [smem:[#allocation0]]
  $region26: #{tpu_custom_call.1} parent=0
    _
  %s5 = ssub.s32 1, %s3
  %s6 = scalar_select 0, %s5, %s3
  $region1: #{tpu_custom_call.1} parent=0
    #allocation2 [shape = 'u8[4096]{0}', space=vmem, size = 0x1000, scoped, tag = 'input window, operand 0, single buffered']
    #allocation3 [shape = 's32[1]{0}', space=sflag, size = 0x4, scoped, tag = 'scoped memory for tpu_custom_call.1']
    #allocation4 [shape = 's32[1]{0}', space=sflag, size = 0x4, scoped, tag = 'scoped memory for tpu_custom_call.1']
    #allocation5 [shape = 'u8[196608]{0}', space=vmem, size = 0x30000, scoped, tag = 'input window, operand 1, single buffered']
    #allocation6 [shape = 's32[1]{0}', space=sflag, size = 0x4, scoped, tag = 'scoped memory for tpu_custom_call.1']
    #allocation7 [shape = 'u8[12288]{0}', space=vmem, size = 0x3000, scoped, tag = 'output window, operand 0, single buffered']
    %7 = vsyncpa [#allocation3], 0
    %8 = vsyncpa [#allocation6], 0
    %9 = vsyncpa [#allocation4], 0
    // Predicated region
    $region2: #{tpu_custom_call.1} parent=1 // pred_check
      _
    $region3: #{tpu_custom_call.1} parent=1 // pred_check_branch
      %11 = sbr.rel (0) target = $region5
    $region4: #{tpu_custom_call.1} parent=1 // pred_region
      %13 = vsyncadd [#allocation3], 0
      %s15 = sshll.u32 %s0, 4
      %s16 = int_to_ptr.hbm [resolvable:$true] %s15
      %s17 = sshll.u32 [#allocation2], 4
      %s18 = int_to_ptr.vmem [resolvable:$true] %s17
      %20 = dma.hbm_to_vmem [thread:$0]  %s16, 128, %s18, [#allocation3]
    $region5: #{tpu_custom_call.1} parent=1 // pred_fallthru
      _
    // Predicated region
    $region6: #{tpu_custom_call.1} parent=1 // pred_check
      _
    $region7: #{tpu_custom_call.1} parent=1 // pred_check_branch
      %22 = sbr.rel (0) target = $region9
    $region8: #{tpu_custom_call.1} parent=1 // pred_region
      %24 = vsyncadd [#allocation6], 0
      %s25 = sshll.u32 %s1, 4
      %s26 = int_to_ptr.hbm [resolvable:$true] %s25
      %s27 = sshll.u32 [#allocation5], 4
      %s28 = int_to_ptr.vmem [resolvable:$true] %s27
      %33 = dma.hbm_to_vmem [thread:$0]  %s26, 6144, %s28, [#allocation6], 384, 384, 24
    $region9: #{tpu_custom_call.1} parent=1 // pred_fallthru
      _
    // Predicated region
    $region10: #{tpu_custom_call.1} parent=1 // pred_check
      _
    $region11: #{tpu_custom_call.1} parent=1 // pred_check_branch
      %35 = sbr.rel (0) target = $region13
    $region12: #{tpu_custom_call.1} parent=1 // pred_region
      %37 = dma.done [#allocation3], 128
    $region13: #{tpu_custom_call.1} parent=1 // pred_fallthru
      _
    // Predicated region
    $region14: #{tpu_custom_call.1} parent=1 // pred_check
      _
    $region15: #{tpu_custom_call.1} parent=1 // pred_check_branch
      %39 = sbr.rel (0) target = $region17
    $region16: #{tpu_custom_call.1} parent=1 // pred_region
      %41 = dma.done [#allocation6], 6144
    $region17: #{tpu_custom_call.1} parent=1 // pred_fallthru
      _
    %v42 = vld [vmem:[#allocation2] sm:$0xff]
    %v43 = vld [vmem:[#allocation5] sm:$0xff]
    %v44 = vld [vmem:[#allocation5 + $0x8] sm:$0xff]
    %v45 = vld [vmem:[#allocation5 + $0x10] sm:$0xff]
    %v46 = vld [vmem:[#allocation5 + $0x18] sm:$0xff]
    %v47 = vld [vmem:[#allocation5 + $0x20] sm:$0xff]
    %v48 = vld [vmem:[#allocation5 + $0x28] sm:$0xff]
    %v49 = vld [vmem:[#allocation5 + $0x30] sm:$0xff]
    %v50 = vld [vmem:[#allocation5 + $0x38] sm:$0xff]
    %v51 = vld [vmem:[#allocation5 + $0x40] sm:$0xff]
    %v52 = vld [vmem:[#allocation5 + $0x48] sm:$0xff]
    %v53 = vld [vmem:[#allocation5 + $0x50] sm:$0xff]
    %v54 = vld [vmem:[#allocation5 + $0x58] sm:$0xff]
    %v55 = vld [vmem:[#allocation5 + $0x60] sm:$0xff]
    %v56 = vld [vmem:[#allocation5 + $0x68] sm:$0xff]
    %v57 = vld [vmem:[#allocation5 + $0x70] sm:$0xff]
    %v58 = vld [vmem:[#allocation5 + $0x78] sm:$0xff]
    %v59 = vld [vmem:[#allocation5 + $0x80] sm:$0xff]
    %v60 = vld [vmem:[#allocation5 + $0x88] sm:$0xff]
    %v61 = vld [vmem:[#allocation5 + $0x90] sm:$0xff]
    %v62 = vld [vmem:[#allocation5 + $0x98] sm:$0xff]
    %v63 = vld [vmem:[#allocation5 + $0xa0] sm:$0xff]
    %v64 = vld [vmem:[#allocation5 + $0xa8] sm:$0xff]
    %v65 = vld [vmem:[#allocation5 + $0xb0] sm:$0xff]
    %v66 = vld [vmem:[#allocation5 + $0xb8] sm:$0xff]
    %v67 = vld [vmem:[#allocation5 + $0xc0] sm:$0xff]
    %v68 = vld [vmem:[#allocation5 + $0xc8] sm:$0xff]
    %v69 = vld [vmem:[#allocation5 + $0xd0] sm:$0xff]
    %v70 = vld [vmem:[#allocation5 + $0xd8] sm:$0xff]
    %v71 = vld [vmem:[#allocation5 + $0xe0] sm:$0xff]
    %v72 = vld [vmem:[#allocation5 + $0xe8] sm:$0xff]
    %v73 = vld [vmem:[#allocation5 + $0xf0] sm:$0xff]
    %v74 = vld [vmem:[#allocation5 + $0xf8] sm:$0xff]
    %v75 = vld [vmem:[#allocation5 + $0x100] sm:$0xff]
    %v76 = vld [vmem:[#allocation5 + $0x108] sm:$0xff]
    %v77 = vld [vmem:[#allocation5 + $0x110] sm:$0xff]
    %v78 = vld [vmem:[#allocation5 + $0x118] sm:$0xff]
    %v79 = vld [vmem:[#allocation5 + $0x120] sm:$0xff]
    %v80 = vld [vmem:[#allocation5 + $0x128] sm:$0xff]
    %v81 = vld [vmem:[#allocation5 + $0x130] sm:$0xff]
    %v82 = vld [vmem:[#allocation5 + $0x138] sm:$0xff]
    %v83 = vld [vmem:[#allocation5 + $0x140] sm:$0xff]
    %v84 = vld [vmem:[#allocation5 + $0x148] sm:$0xff]
    %v85 = vld [vmem:[#allocation5 + $0x150] sm:$0xff]
    %v86 = vld [vmem:[#allocation5 + $0x158] sm:$0xff]
    %v87 = vld [vmem:[#allocation5 + $0x160] sm:$0xff]
    %v88 = vld [vmem:[#allocation5 + $0x168] sm:$0xff]
    %v89 = vld [vmem:[#allocation5 + $0x170] sm:$0xff]
    %v90 = vld [vmem:[#allocation5 + $0x178] sm:$0xff]
    %91 = vmatpush.msra.mxu0 %v88
    %92 = vmatpush.msra.mxu0 %v85
    %93 = vmatpush.msra.mxu0 %v82
    %94 = vmatpush.msra.mxu0 %v79
    %95 = vmatpush.msra.mxu0 %v76
    %96 = vmatpush.msra.mxu0 %v73
    %97 = vmatpush.msra.mxu0 %v70
    %98 = vmatpush.msra.mxu0 %v67
    %99 = vmatpush.msra.mxu0 %v64
    %100 = vmatpush.msra.mxu0 %v61
    %101 = vmatpush.msra.mxu0 %v58
    %102 = vmatpush.msra.mxu0 %v55
    %103 = vmatpush.msra.mxu0 %v52
    %104 = vmatpush.msra.mxu0 %v49
    %105 = vmatpush.msra.mxu0 %v46
    %106 = vmatpush.msra.mxu0 %v43
    %107 = vmatmul.f32.gmra.mxu0 %v42
    %v108 = vpop.f32.mrf.mxu0
    %v109 = vadd.f32 0.0, %v108
    %110 = vdwg.mxu0
    %111 = vmatpush.msra.mxu0 %v89
    %112 = vmatpush.msra.mxu0 %v86
    %113 = vmatpush.msra.mxu0 %v83
    %114 = vmatpush.msra.mxu0 %v80
    %115 = vmatpush.msra.mxu0 %v77
    %116 = vmatpush.msra.mxu0 %v74
    %117 = vmatpush.msra.mxu0 %v71
    %118 = vmatpush.msra.mxu0 %v68
    %119 = vmatpush.msra.mxu0 %v65
    %120 = vmatpush.msra.mxu0 %v62
    %121 = vmatpush.msra.mxu0 %v59
    %122 = vmatpush.msra.mxu0 %v56
    %123 = vmatpush.msra.mxu0 %v53
    %124 = vmatpush.msra.mxu0 %v50
    %125 = vmatpush.msra.mxu0 %v47
    %126 = vmatpush.msra.mxu0 %v44
    %127 = vmatmul.f32.gmra.mxu0 %v42
    %v128 = vpop.f32.mrf.mxu0
    %v129 = vadd.f32 0.0, %v128
    %130 = vdwg.mxu0
    %131 = vmatpush.msra.mxu0 %v90
    %132 = vmatpush.msra.mxu0 %v87
    %133 = vmatpush.msra.mxu0 %v84
    %134 = vmatpush.msra.mxu0 %v81
    %135 = vmatpush.msra.mxu0 %v78
    %136 = vmatpush.msra.mxu0 %v75
    %137 = vmatpush.msra.mxu0 %v72
    %138 = vmatpush.msra.mxu0 %v69
    %139 = vmatpush.msra.mxu0 %v66
    %140 = vmatpush.msra.mxu0 %v63
    %141 = vmatpush.msra.mxu0 %v60
    %142 = vmatpush.msra.mxu0 %v57
    %143 = vmatpush.msra.mxu0 %v54
    %144 = vmatpush.msra.mxu0 %v51
    %145 = vmatpush.msra.mxu0 %v48
    %146 = vmatpush.msra.mxu0 %v45
    %147 = vmatmul.f32.gmra.mxu0 %v42
    %v148 = vpop.f32.mrf.mxu0
    %v149 = vadd.f32 0.0, %v148
    %150 = vdwg.mxu0
    %v151 = vmax.f32 %v109, 0.0
    %v152 = vmax.f32 %v129, 0.0
    %v153 = vmax.f32 %v149, 0.0
    %154 = vst [vmem:[#allocation7] sm:$0xff] %v151
    %155 = vst [vmem:[#allocation7 + $0x8] sm:$0xff] %v152
    %156 = vst [vmem:[#allocation7 + $0x10] sm:$0xff] %v153
    // Predicated region
    $region18: #{tpu_custom_call.1} parent=1 // pred_check
      _
    $region19: #{tpu_custom_call.1} parent=1 // pred_check_branch
      %158 = sbr.rel (0) target = $region21
    $region20: #{tpu_custom_call.1} parent=1 // pred_region
      %160 = vsyncadd [#allocation4], 0
      %s162 = sshll.u32 [#allocation7], 4
      %s163 = int_to_ptr.vmem [resolvable:$true] %s162
      %s164 = sshll.u32 %s2, 4
      %s165 = int_to_ptr.hbm [resolvable:$true] %s164
      %167 = dma.vmem_to_hbm [thread:$0]  %s163, 384, %s165, [#allocation4]
    $region21: #{tpu_custom_call.1} parent=1 // pred_fallthru
      _
    // Predicated region
    $region22: #{tpu_custom_call.1} parent=1 // pred_check
      _
    $region23: #{tpu_custom_call.1} parent=1 // pred_check_branch
      %169 = sbr.rel (0) target = $region25
    $region24: #{tpu_custom_call.1} parent=1 // pred_region
      %171 = dma.done [#allocation4], 384
    $region25: #{tpu_custom_call.1} parent=1 // pred_fallthru
      _
    %172 = vsyncpa [#allocation3], 1
    %173 = vsyncpa [#allocation6], 1
    %174 = vsyncpa [#allocation4], 1

</llo_original>
